<compile_context>
chip_gen: v7x
topology: tpu7x:2x2x1
jax: 0.10.0
libtpu: 0.0.40
codegen_flags: <defaults>
</compile_context>

<pallas_src>
import math
import numpy as np
import jax
import jax.numpy as jnp
from jax.experimental import pallas as pl
from jax.experimental.pallas import tpu as pltpu


# ----------------------------------------------------------------------------------
# Kernel: one (block_rows, C) tile per grid step.
# ----------------------------------------------------------------------------------
def _bias_free_ln_kernel(x_ref, w_ref, o_ref):
    x = x_ref[...].astype(jnp.float32)                  # (TM, C)
    w = w_ref[...].astype(jnp.float32)                  # (1, C) -> broadcasts over rows
    mu = jnp.mean(x, axis=-1, keepdims=True)            # (TM, 1)
    ex2 = jnp.mean(x * x, axis=-1, keepdims=True)       # (TM, 1)
    var = jnp.maximum(ex2 - mu * mu, 0.0)               # unbiased=False variance
    inv = jax.lax.rsqrt(var + 1e-5)                     # EUP rsqrt
    # BiasFree: scale x itself (mean is NOT subtracted in the output).
    o_ref[...] = (x * (inv * w)).astype(o_ref.dtype)    # single lane-dense store


def _round_up(n, m):
    return ((n + m - 1) // m) * m


# ----------------------------------------------------------------------------------
# Wrapper: flatten leading dims into one row axis, tile rows by bytes, pallas_call.
# ----------------------------------------------------------------------------------
def bias_free_layer_norm(x, weight, *, target_block_bytes=2 * 1024 * 1024):
    orig_shape = x.shape
    C = orig_shape[-1]
    assert weight.shape == (C,), "weight must match the normalized (last) dim"

    rows = math.prod(orig_shape[:-1]) if len(orig_shape) > 1 else 1
    x2 = x.reshape(rows, C)
    w2 = weight.reshape(1, C)

    # Dtype-specific sublane multiple: 8 for f32, 16 for bf16/f16, 32 for 8-bit.
    itemsize = jnp.dtype(x.dtype).itemsize
    sub_mult = max(8, 32 // itemsize)

    # Row tile sized by f32 compute bytes (~2 MiB), rounded to the sublane multiple.
    block_rows = max(sub_mult, (target_block_bytes // (C * 4)) // sub_mult * sub_mult)
    # Cap so the grid has >= 2 steps whenever possible (v7x megacore sharding).
    half_rows = _round_up(pl.cdiv(rows, 2), sub_mult)
    block_rows = min(block_rows, max(sub_mult, half_rows))

    grid = (pl.cdiv(rows, block_rows),)   # ragged edge handled by masked writes

    # TODO(synk): if C is not a multiple of 128 (e.g. Restormer C=48/96), stores
    # become masked vst; pad C to 128 once upstream and divide by the true C.
    out = pl.pallas_call(
        _bias_free_ln_kernel,
        out_shape=jax.ShapeDtypeStruct((rows, C), x.dtype),
        grid_spec=pltpu.PrefetchScalarGridSpec(
            num_scalar_prefetch=0,
            grid=grid,
            in_specs=[
                pl.BlockSpec((block_rows, C), lambda i: (i, 0)),
                pl.BlockSpec((1, C), lambda i: (0, 0)),   # grid-invariant weight
            ],
            out_specs=pl.BlockSpec((block_rows, C), lambda i: (i, 0)),
        ),
        compiler_params=pltpu.CompilerParams(
            dimension_semantics=("parallel",),
        ),
    )(x2, w2)

    return out.reshape(orig_shape)


# ----------------------------------------------------------------------------------
# Pure-JAX reference (faithful port of the PyTorch module) for validation.
# ----------------------------------------------------------------------------------
def bias_free_layer_norm_ref(x, weight):
    x32 = x.astype(jnp.float32)
    sigma = jnp.var(x32, axis=-1, keepdims=True)        # unbiased=False
    return (x32 / jnp.sqrt(sigma + 1e-5) * weight.astype(jnp.float32)).astype(x.dtype)


if __name__ == "__main__":
    # xrestomer applies this LayerNorm to (b, h*w, c): batch=2, h=w=16, channels=128.
    B, HW, C = 2, 256, 128
    key = jax.random.PRNGKey(0)
    kx, kw = jax.random.split(key, 2)
    x = jax.random.normal(kx, (B, HW, C), jnp.float32) * 2.0 + 0.5
    weight = 1.0 + 0.1 * jax.random.normal(kw, (C,), jnp.float32)

    out = jax.block_until_ready(bias_free_layer_norm(x, weight))
    ref = jax.block_until_ready(bias_free_layer_norm_ref(x, weight))
    np.testing.assert_allclose(np.asarray(out), np.asarray(ref), rtol=1e-5, atol=1e-5)
    print("KERNEL_OK")
</pallas_src>

<mosaic_0001>
module attributes {stable_mosaic.version = 11 : i64} {
  func.func @_bias_free_ln_kernel(%arg0: i32, %arg1: memref<256x128xf32, #tpu.memory_space<vmem>>, %arg2: memref<1x128xf32, #tpu.memory_space<vmem>>, %arg3: memref<256x128xf32, #tpu.memory_space<vmem>>) attributes {dimension_semantics = [#tpu.dimension_semantics<parallel>], iteration_bounds = array<i64: 2>, scalar_prefetch = 0 : i64, scratch_operands = 0 : i64, tpu.core_type = #tpu.core_type<tc>, window_params = [{transform_indices = @transform_0, window_bounds = array<i64: 256, 128>}, {pipeline_mode = #tpu.pipeline_mode<synchronous>, transform_indices = @transform_1, window_bounds = array<i64: 1, 128>}, {transform_indices = @transform_2, window_bounds = array<i64: 256, 128>}]} {
    %c0 = arith.constant 0 : index
    %c0_0 = arith.constant 0 : index
    %0 = vector.load %arg1[%c0, %c0_0] : memref<256x128xf32, #tpu.memory_space<vmem>>, vector<256x128xf32>
    %c0_1 = arith.constant 0 : index
    %c0_2 = arith.constant 0 : index
    %1 = vector.load %arg2[%c0_1, %c0_2] : memref<1x128xf32, #tpu.memory_space<vmem>>, vector<1x128xf32>
    %cst = arith.constant dense<0.000000e+00> : vector<256xf32>
    %2 = vector.multi_reduction <add>, %0, %cst [1] : vector<256x128xf32> to vector<256xf32>
    %3 = vector.shape_cast %2 : vector<256xf32> to vector<256x1xf32>
    %cst_3 = arith.constant 1.280000e+02 : f32
    %4 = vector.broadcast %cst_3 : f32 to vector<256x1xf32>
    %5 = arith.divf %3, %4 : vector<256x1xf32>
    %6 = arith.mulf %0, %0 : vector<256x128xf32>
    %cst_4 = arith.constant dense<0.000000e+00> : vector<256xf32>
    %7 = vector.multi_reduction <add>, %6, %cst_4 [1] : vector<256x128xf32> to vector<256xf32>
    %8 = vector.shape_cast %7 : vector<256xf32> to vector<256x1xf32>
    %cst_5 = arith.constant 1.280000e+02 : f32
    %9 = vector.broadcast %cst_5 : f32 to vector<256x1xf32>
    %10 = arith.divf %8, %9 : vector<256x1xf32>
    %11 = arith.mulf %5, %5 : vector<256x1xf32>
    %12 = arith.subf %10, %11 : vector<256x1xf32>
    %cst_6 = arith.constant 0.000000e+00 : f32
    %13 = vector.broadcast %cst_6 : f32 to vector<256x1xf32>
    %14 = arith.maximumf %12, %13 : vector<256x1xf32>
    %cst_7 = arith.constant 9.99999974E-6 : f32
    %15 = vector.broadcast %cst_7 : f32 to vector<256x1xf32>
    %16 = arith.addf %14, %15 : vector<256x1xf32>
    %17 = math.rsqrt %16 : vector<256x1xf32>
    %18 = vector.broadcast %17 : vector<256x1xf32> to vector<256x128xf32>
    %19 = vector.broadcast %1 : vector<1x128xf32> to vector<256x128xf32>
    %20 = arith.mulf %18, %19 : vector<256x128xf32>
    %21 = arith.mulf %0, %20 : vector<256x128xf32>
    %c0_8 = arith.constant 0 : index
    %c0_9 = arith.constant 0 : index
    %22 = vector.load %arg3[%c0_8, %c0_9] : memref<256x128xf32, #tpu.memory_space<vmem>>, vector<256x128xf32>
    tpu.vector_store %arg3[%c0_8, %c0_9], %21 {strides = array<i32>} : memref<256x128xf32, #tpu.memory_space<vmem>>, vector<256x128xf32>,
    return
  }
  func.func @transform_0(%arg0: i32) -> (i32, i32) {
    %c0_i32 = arith.constant 0 : i32
    %c0_i32_0 = arith.constant 0 : i32
    return %arg0, %c0_i32 : i32, i32
  }
  func.func @transform_1(%arg0: i32) -> (i32, i32) {
    %c0_i32 = arith.constant 0 : i32
    %c0_i32_0 = arith.constant 0 : i32
    %c0_i32_1 = arith.constant 0 : i32
    return %c0_i32, %c0_i32_0 : i32, i32
  }
  func.func @transform_2(%arg0: i32) -> (i32, i32) {
    %c0_i32 = arith.constant 0 : i32
    %c0_i32_0 = arith.constant 0 : i32
    return %arg0, %c0_i32 : i32, i32
  }
}

</mosaic_0001>

<llo_original>
// kernel: tpu_custom_call.1
$region0: #{tpu_custom_call.1}
  #allocation0 [shape = 'u32[]', space=smem, size = 0x4, offset = 0x4, fixed_abs, tag = 'smem constant byte address 0x4 - core index']
  #allocation1 [shape = 'u32[144,128]{1,0:T(1,128)}', space=vmem, size = 0x12000, scoped, tag = 'internal scratch']
  %s0 = inlined_call_operand.hbm [shape: f32[512,128], index: 0, kind: input, shape index: {}]
  %s1 = inlined_call_operand.vmem [shape: f32[1,128], index: 1, kind: input, shape index: {}]
  %s2 = inlined_call_operand.hbm [shape: f32[512,128], index: 2, kind: output, shape index: {}]
  %s3 = sld [smem:[#allocation0]]
  $region45: #{tpu_custom_call.1} parent=0
    _
  %s5 = ssub.s32 1, %s3
  %s6 = scalar_select 0, %s5, %s3
  $region1: #{tpu_custom_call.1} parent=0
    #allocation2 [shape = 'u8[262144]{0}', space=vmem, size = 0x40000, scoped, tag = 'input window, operand 0']
    #allocation3 [shape = 's32[2]{0}', space=sflag, size = 0x8, scoped, tag = 'scoped memory for tpu_custom_call.1']
    #allocation4 [shape = 's32[2]{0}', space=sflag, size = 0x8, scoped, tag = 'scoped memory for tpu_custom_call.1']
    #allocation5 [shape = 'u8[262144]{0}', space=vmem, size = 0x40000, scoped, tag = 'output window, operand 0']
    %7 = vsyncpa [#allocation3], 0
    %s8 = scalar_lea.sflag [#allocation3], 1
    %9 = vsyncpa %s8, 0
    %10 = vsyncpa [#allocation4], 0
    %s11 = scalar_lea.sflag [#allocation4], 1
    %12 = vsyncpa %s11, 0
    loop: start=0, step=1, limit=4
    $region2: #{tpu_custom_call.1} parent=1 // loop_pre_header
      _
    $region3: #{tpu_custom_call.1} parent=1 // loop_header
      %s14 = sphi 0, %s18
      %p15 = scmp.ge.s32.totalorder %s14, 4
      %s24 = sphi 0, %s26
      %s27 = sphi 0, %s24
      %s28 = sphi 0, %s27
      %s44 = sphi 0, %s28
      %s48 = sphi 0, %s48
      %s50 = sphi 0, %s48
      %s51 = sphi 0, %s50
      %s65 = sphi 0, %s51
      %s71 = sphi 0, %s73
      %s74 = sphi 0, %s71
      %s75 = sphi 0, %s74
      %s91 = sphi 0, %s75
    $region4: #{tpu_custom_call.1} parent=1 // loop_header_branch
      %17 = sbr.rel (%p15) target = $region8
    $region5: #{tpu_custom_call.1} parent=1 // loop_body
      %s19 = ssub.s32 %s14, 1
      %s20 = ssub.s32 %s14, 2
      %s21 = sadd.s32 %s14, 1
      %s22 = ssub.s32 %s14, %s21
      %p23 = scmp.eq.s32.totalorder %s22, 0
      %s25 = sadd.s32 %s24, 1
      %s26 = scalar_select %p23, %s24, %s25
      %p29 = pneg %p23
      %p30 = scmp.eq.s32.totalorder %s14, 1
      %p31 = por %p29, %p30
      %p32 = scmp.ne.s32.totalorder %s24, %s27
      %p33 = scmp.eq.s32.totalorder %s14, 0
      %p34 = por %p32, %p33
      %p35 = scmp.ne.s32.totalorder %s24, %s27
      %p36 = scmp.eq.s32.totalorder %s19, 1
      %p37 = por %p35, %p36
      %p38 = scmp.ne.s32.totalorder %s27, %s28
      %p39 = scmp.eq.s32.totalorder %s19, 0
      %p40 = por %p38, %p39
      %p41 = scmp.ne.s32.totalorder %s27, %s28
      %p42 = scmp.eq.s32.totalorder %s20, 1
      %p43 = por %p41, %p42
      %p45 = scmp.ne.s32.totalorder %s28, %s44
      %p46 = scmp.eq.s32.totalorder %s20, 0
      %p47 = por %p45, %p46
      %s49 = sadd.s32 %s48, 1
      %p52 = scmp.eq.s32.totalorder %s14, 1
      %p53 = scmp.ne.s32.totalorder %s48, %s50
      %p54 = scmp.eq.s32.totalorder %s14, 0
      %p55 = por %p53, %p54
      %p56 = scmp.ne.s32.totalorder %s48, %s50
      %p57 = scmp.eq.s32.totalorder %s19, 1
      %p58 = por %p56, %p57
      %p59 = scmp.ne.s32.totalorder %s50, %s51
      %p60 = scmp.eq.s32.totalorder %s19, 0
      %p61 = por %p59, %p60
      %p62 = scmp.ne.s32.totalorder %s50, %s51
      %p63 = scmp.eq.s32.totalorder %s20, 1
      %p64 = por %p62, %p63
      %p66 = scmp.ne.s32.totalorder %s51, %s65
      %p67 = scmp.eq.s32.totalorder %s20, 0
      %p68 = por %p66, %p67
      %s69 = ssub.s32 %s14, %s21
      %p70 = scmp.eq.s32.totalorder %s69, 0
      %s72 = sadd.s32 %s71, 1
      %s73 = scalar_select %p70, %s71, %s72
      %p76 = pneg %p70
      %p77 = scmp.eq.s32.totalorder %s14, 1
      %p78 = por %p76, %p77
      %p79 = scmp.ne.s32.totalorder %s71, %s74
      %p80 = scmp.eq.s32.totalorder %s14, 0
      %p81 = por %p79, %p80
      %p82 = scmp.ne.s32.totalorder %s71, %s74
      %p83 = scmp.eq.s32.totalorder %s19, 1
      %p84 = por %p82, %p83
      %p85 = scmp.ne.s32.totalorder %s74, %s75
      %p86 = scmp.eq.s32.totalorder %s19, 0
      %p87 = por %p85, %p86
      %p88 = scmp.ne.s32.totalorder %s74, %s75
      %p89 = scmp.eq.s32.totalorder %s20, 1
      %p90 = por %p88, %p89
      %p92 = scmp.ne.s32.totalorder %s75, %s91
      %p93 = scmp.eq.s32.totalorder %s20, 0
      %p94 = por %p92, %p93
      %p95 = scmp.le.s32.totalorder 1, %s14
      %p96 = scmp.lt.s32.totalorder %s14, 3
      %p97 = pnand %p95, %p96
      %p98 = pneg %p97
      // Predicated region
      $region9: #{tpu_custom_call.1} parent=5 // pred_check
        _
      $region10: #{tpu_custom_call.1} parent=5 // pred_check_branch
        %100 = sbr.rel (%p97) target = $region12
      $region11: #{tpu_custom_call.1} parent=5 // pred_region
        %s101 = ssub.s32 %s14, 1
        // Predicated region
        $region13: #{tpu_custom_call.1} parent=11 // pred_check
          %p102 = pneg %p61
        $region14: #{tpu_custom_call.1} parent=11 // pred_check_branch
          %104 = sbr.rel (%p102) target = $region16
        $region15: #{tpu_custom_call.1} parent=11 // pred_region
          _
        $region16: #{tpu_custom_call.1} parent=11 // pred_fallthru
          _
      $region12: #{tpu_custom_call.1} parent=5 // pred_fallthru
        _
      %p105 = scmp.lt.s32.totalorder %s14, 2
      // Predicated region
      $region17: #{tpu_custom_call.1} parent=5 // pred_check
        %p106 = pneg %p105
      $region18: #{tpu_custom_call.1} parent=5 // pred_check_branch
        %108 = sbr.rel (%p106) target = $region20
      $region19: #{tpu_custom_call.1} parent=5 // pred_region
        // Predicated region
        $region21: #{tpu_custom_call.1} parent=19 // pred_check
          %p109 = pneg %p34
        $region22: #{tpu_custom_call.1} parent=19 // pred_check_branch
          %111 = sbr.rel (%p109) target = $region24
        $region23: #{tpu_custom_call.1} parent=19 // pred_region
          %s112 = sand.u32 %s24, 1
          %s113 = scalar_lea.sflag [#allocation3], %s112
          %s114 = sand.u32 %s24, 1
          %s115 = smul.addr %s114, 256
          %s116 = scalar_lea.vmem [#allocation2], %s115
          %s117 = smul.u32 32, %s14
          %s119 = ssub.s32 4096, 4096
          %120 = vsyncadd %s113, %s119
          %s121 = smul.addr %s117, 128
          %s122 = scalar_lea.hbm %s0, %s121
          %s123 = sshll.u32 %s116, 4
          %s124 = int_to_ptr.vmem [resolvable:$true] %s123
          %129 = dma.hbm_to_vmem [thread:$0]  %s122, 4096, %s124, %s113, 128, 128, 8
        $region24: #{tpu_custom_call.1} parent=19 // pred_fallthru
          _
      $region20: #{tpu_custom_call.1} parent=5 // pred_fallthru
        _
      %p130 = scmp.le.s32.totalorder 1, %s14
      %p131 = scmp.lt.s32.totalorder %s14, 3
      %p132 = pnand %p130, %p131
      %p133 = pneg %p132
      // Predicated region
      $region25: #{tpu_custom_call.1} parent=5 // pred_check
        _
      $region26: #{tpu_custom_call.1} parent=5 // pred_check_branch
        %135 = sbr.rel (%p132) target = $region28
      $region27: #{tpu_custom_call.1} parent=5 // pred_region
        %s136 = ssub.s32 %s14, 1
        %s137 = sand.u32 %s27, 1
        %s138 = scalar_lea.sflag [#allocation3], %s137
        %s139 = sand.u32 %s27, 1
        %s140 = smul.addr %s139, 256
        %s141 = scalar_lea.vmem [#allocation2], %s140
        // Predicated region
        $region29: #{tpu_custom_call.1} parent=27 // pred_check
          %p142 = pneg %p40
        $region30: #{tpu_custom_call.1} parent=27 // pred_check_branch
          %144 = sbr.rel (%p142) target = $region32
        $region31: #{tpu_custom_call.1} parent=27 // pred_region
          %145 = dma.done %s138, 4096
        $region32: #{tpu_custom_call.1} parent=27 // pred_fallthru
          _
        %s146 = sand.u32 %s27, 1
        %s147 = scalar_lea.sflag [#allocation3], %s146
        %s148 = sand.u32 %s27, 1
        %s149 = smul.addr %s148, 256
        %s150 = scalar_lea.vmem [#allocation2], %s149
        %p151 = pneg %p40
        %p152 = pneg %p37
        %p153 = pneg %p61
        %p154 = pneg %p58
        %p155 = pneg %p87
        %p156 = pneg %p84
        %s157 = sand.u32 %s74, 1
        %s158 = scalar_lea.sflag [#allocation4], %s157
        %s159 = sand.u32 %s74, 1
        %s160 = smul.addr %s159, 256
        %s161 = scalar_lea.vmem [#allocation5], %s160
        %s162 = smul.u32 32, %s19
        %s163 = smul.u32 32, %s19
        %v164 = vld [vmem:[%s141] sm:$0xff]
        %v165 = vld [vmem:[%s141 + $0x8] sm:$0xff]
        %v166 = vld [vmem:[%s141 + $0x10] sm:$0xff]
        %v167 = vld [vmem:[%s141 + $0x18] sm:$0xff]
        %v168 = vld [vmem:[%s141 + $0x20] sm:$0xff]
        %v169 = vld [vmem:[%s141 + $0x28] sm:$0xff]
        %v170 = vld [vmem:[%s141 + $0x30] sm:$0xff]
        %v171 = vld [vmem:[%s141 + $0x38] sm:$0xff]
        %v172 = vld [vmem:[%s141 + $0x40] sm:$0xff]
        %v173 = vld [vmem:[%s141 + $0x48] sm:$0xff]
        %v174 = vld [vmem:[%s141 + $0x50] sm:$0xff]
        %v175 = vld [vmem:[%s141 + $0x58] sm:$0xff]
        %v176 = vld [vmem:[%s141 + $0x60] sm:$0xff]
        %v177 = vld [vmem:[%s141 + $0x68] sm:$0xff]
        %v178 = vld [vmem:[%s141 + $0x70] sm:$0xff]
        %v179 = vld [vmem:[%s141 + $0x78] sm:$0xff]
        %v180 = vld [vmem:[%s141 + $0x80] sm:$0xff]
        %v181 = vld [vmem:[%s141 + $0x88] sm:$0xff]
        %v182 = vld [vmem:[%s141 + $0x90] sm:$0xff]
        %v183 = vld [vmem:[%s141 + $0x98] sm:$0xff]
        %v184 = vld [vmem:[%s141 + $0xa0] sm:$0xff]
        %v185 = vld [vmem:[%s141 + $0xa8] sm:$0xff]
        %v186 = vld [vmem:[%s141 + $0xb0] sm:$0xff]
        %v187 = vld [vmem:[%s141 + $0xb8] sm:$0xff]
        %v188 = vld [vmem:[%s141 + $0xc0] sm:$0xff]
        %v189 = vld [vmem:[%s141 + $0xc8] sm:$0xff]
        %v190 = vld [vmem:[%s141 + $0xd0] sm:$0xff]
        %v191 = vld [vmem:[%s141 + $0xd8] sm:$0xff]
        %v192 = vld [vmem:[%s141 + $0xe0] sm:$0xff]
        %v193 = vld [vmem:[%s141 + $0xe8] sm:$0xff]
        %v194 = vld [vmem:[%s141 + $0xf0] sm:$0xff]
        %v195 = vld [vmem:[%s141 + $0xf8] sm:$0xff]
        %v196 = vld [vmem:[%s1] sm:$0x1]
        %197 = vadd.xlane.f32.xlu0 %v164
        %v198 = vpop.xlane.xlu0 %197
        %199 = vadd.xlane.f32.xlu0 %v165
        %v200 = vpop.xlane.xlu0 %199
        %201 = vadd.xlane.f32.xlu0 %v166
        %v202 = vpop.xlane.xlu0 %201
        %203 = vadd.xlane.f32.xlu0 %v167
        %v204 = vpop.xlane.xlu0 %203
        %205 = vadd.xlane.f32.xlu0 %v168
        %v206 = vpop.xlane.xlu0 %205
        %207 = vadd.xlane.f32.xlu0 %v169
        %v208 = vpop.xlane.xlu0 %207
        %209 = vadd.xlane.f32.xlu0 %v170
        %v210 = vpop.xlane.xlu0 %209
        %211 = vadd.xlane.f32.xlu0 %v171
        %v212 = vpop.xlane.xlu0 %211
        %213 = vadd.xlane.f32.xlu0 %v172
        %v214 = vpop.xlane.xlu0 %213
        %215 = vadd.xlane.f32.xlu0 %v173
        %v216 = vpop.xlane.xlu0 %215
        %217 = vadd.xlane.f32.xlu0 %v174
        %v218 = vpop.xlane.xlu0 %217
        %219 = vadd.xlane.f32.xlu0 %v175
        %v220 = vpop.xlane.xlu0 %219
        %221 = vadd.xlane.f32.xlu0 %v176
        %v222 = vpop.xlane.xlu0 %221
        %223 = vadd.xlane.f32.xlu0 %v177
        %v224 = vpop.xlane.xlu0 %223
        %225 = vadd.xlane.f32.xlu0 %v178
        %v226 = vpop.xlane.xlu0 %225
        %227 = vadd.xlane.f32.xlu0 %v179
        %v228 = vpop.xlane.xlu0 %227
        %229 = vadd.xlane.f32.xlu0 %v180
        %v230 = vpop.xlane.xlu0 %229
        %231 = vadd.xlane.f32.xlu0 %v181
        %v232 = vpop.xlane.xlu0 %231
        %233 = vadd.xlane.f32.xlu0 %v182
        %v234 = vpop.xlane.xlu0 %233
        %235 = vadd.xlane.f32.xlu0 %v183
        %v236 = vpop.xlane.xlu0 %235
        %237 = vadd.xlane.f32.xlu0 %v184
        %v238 = vpop.xlane.xlu0 %237
        %239 = vadd.xlane.f32.xlu0 %v185
        %v240 = vpop.xlane.xlu0 %239
        %241 = vadd.xlane.f32.xlu0 %v186
        %v242 = vpop.xlane.xlu0 %241
        %243 = vadd.xlane.f32.xlu0 %v187
        %v244 = vpop.xlane.xlu0 %243
        %245 = vadd.xlane.f32.xlu0 %v188
        %v246 = vpop.xlane.xlu0 %245
        %247 = vadd.xlane.f32.xlu0 %v189
        %v248 = vpop.xlane.xlu0 %247
        %249 = vadd.xlane.f32.xlu0 %v190
        %v250 = vpop.xlane.xlu0 %249
        %251 = vadd.xlane.f32.xlu0 %v191
        %v252 = vpop.xlane.xlu0 %251
        %253 = vadd.xlane.f32.xlu0 %v192
        %v254 = vpop.xlane.xlu0 %253
        %255 = vadd.xlane.f32.xlu0 %v193
        %v256 = vpop.xlane.xlu0 %255
        %257 = vadd.xlane.f32.xlu0 %v194
        %v258 = vpop.xlane.xlu0 %257
        %259 = vadd.xlane.f32.xlu0 %v195
        %v260 = vpop.xlane.xlu0 %259
        %v261 = vrcp.pop 128.0
        %v262 = vmul.f32 %v198, %v261
        %v263 = vmul.f32 %v200, %v261
        %v264 = vmul.f32 %v202, %v261
        %v265 = vmul.f32 %v204, %v261
        %v266 = vmul.f32 %v206, %v261
        %v267 = vmul.f32 %v208, %v261
        %v268 = vmul.f32 %v210, %v261
        %v269 = vmul.f32 %v212, %v261
        %v270 = vmul.f32 %v214, %v261
        %v271 = vmul.f32 %v216, %v261
        %v272 = vmul.f32 %v218, %v261
        %v273 = vmul.f32 %v220, %v261
        %v274 = vmul.f32 %v222, %v261
        %v275 = vmul.f32 %v224, %v261
        %v276 = vmul.f32 %v226, %v261
        %v277 = vmul.f32 %v228, %v261
        %v278 = vmul.f32 %v230, %v261
        %v279 = vmul.f32 %v232, %v261
        %v280 = vmul.f32 %v234, %v261
        %v281 = vmul.f32 %v236, %v261
        %v282 = vmul.f32 %v238, %v261
        %v283 = vmul.f32 %v240, %v261
        %v284 = vmul.f32 %v242, %v261
        %v285 = vmul.f32 %v244, %v261
        %v286 = vmul.f32 %v246, %v261
        %v287 = vmul.f32 %v248, %v261
        %v288 = vmul.f32 %v250, %v261
        %v289 = vmul.f32 %v252, %v261
        %v290 = vmul.f32 %v254, %v261
        %v291 = vmul.f32 %v256, %v261
        %v292 = vmul.f32 %v258, %v261
        %v293 = vmul.f32 %v260, %v261
        %v294 = vmul.f32 %v164, %v164
        %v295 = vmul.f32 %v165, %v165
        %v296 = vmul.f32 %v166, %v166
        %v297 = vmul.f32 %v167, %v167
        %v298 = vmul.f32 %v168, %v168
        %v299 = vmul.f32 %v169, %v169
        %v300 = vmul.f32 %v170, %v170
        %v301 = vmul.f32 %v171, %v171
        %v302 = vmul.f32 %v172, %v172
        %v303 = vmul.f32 %v173, %v173
        %v304 = vmul.f32 %v174, %v174
        %v305 = vmul.f32 %v175, %v175
        %v306 = vmul.f32 %v176, %v176
        %v307 = vmul.f32 %v177, %v177
        %v308 = vmul.f32 %v178, %v178
        %v309 = vmul.f32 %v179, %v179
        %v310 = vmul.f32 %v180, %v180
        %v311 = vmul.f32 %v181, %v181
        %v312 = vmul.f32 %v182, %v182
        %v313 = vmul.f32 %v183, %v183
        %v314 = vmul.f32 %v184, %v184
        %v315 = vmul.f32 %v185, %v185
        %v316 = vmul.f32 %v186, %v186
        %v317 = vmul.f32 %v187, %v187
        %v318 = vmul.f32 %v188, %v188
        %v319 = vmul.f32 %v189, %v189
        %v320 = vmul.f32 %v190, %v190
        %v321 = vmul.f32 %v191, %v191
        %v322 = vmul.f32 %v192, %v192
        %v323 = vmul.f32 %v193, %v193
        %v324 = vmul.f32 %v194, %v194
        %v325 = vmul.f32 %v195, %v195
        %326 = vadd.xlane.f32.xlu0 %v294
        %v327 = vpop.xlane.xlu0 %326
        %328 = vadd.xlane.f32.xlu0 %v295
        %v329 = vpop.xlane.xlu0 %328
        %330 = vadd.xlane.f32.xlu0 %v296
        %v331 = vpop.xlane.xlu0 %330
        %332 = vadd.xlane.f32.xlu0 %v297
        %v333 = vpop.xlane.xlu0 %332
        %334 = vadd.xlane.f32.xlu0 %v298
        %v335 = vpop.xlane.xlu0 %334
        %336 = vadd.xlane.f32.xlu0 %v299
        %v337 = vpop.xlane.xlu0 %336
        %338 = vadd.xlane.f32.xlu0 %v300
        %v339 = vpop.xlane.xlu0 %338
        %340 = vadd.xlane.f32.xlu0 %v301
        %v341 = vpop.xlane.xlu0 %340
        %342 = vadd.xlane.f32.xlu0 %v302
        %v343 = vpop.xlane.xlu0 %342
        %344 = vadd.xlane.f32.xlu0 %v303
        %v345 = vpop.xlane.xlu0 %344
        %346 = vadd.xlane.f32.xlu0 %v304
        %v347 = vpop.xlane.xlu0 %346
        %348 = vadd.xlane.f32.xlu0 %v305
        %v349 = vpop.xlane.xlu0 %348
        %350 = vadd.xlane.f32.xlu0 %v306
        %v351 = vpop.xlane.xlu0 %350
        %352 = vadd.xlane.f32.xlu0 %v307
        %v353 = vpop.xlane.xlu0 %352
        %354 = vadd.xlane.f32.xlu0 %v308
        %v355 = vpop.xlane.xlu0 %354
        %356 = vadd.xlane.f32.xlu0 %v309
        %v357 = vpop.xlane.xlu0 %356
        %358 = vadd.xlane.f32.xlu0 %v310
        %v359 = vpop.xlane.xlu0 %358
        %360 = vadd.xlane.f32.xlu0 %v311
        %v361 = vpop.xlane.xlu0 %360
        %362 = vadd.xlane.f32.xlu0 %v312
        %v363 = vpop.xlane.xlu0 %362
        %364 = vadd.xlane.f32.xlu0 %v313
        %v365 = vpop.xlane.xlu0 %364
        %366 = vadd.xlane.f32.xlu0 %v314
        %v367 = vpop.xlane.xlu0 %366
        %368 = vadd.xlane.f32.xlu0 %v315
        %v369 = vpop.xlane.xlu0 %368
        %370 = vadd.xlane.f32.xlu0 %v316
        %v371 = vpop.xlane.xlu0 %370
        %372 = vadd.xlane.f32.xlu0 %v317
        %v373 = vpop.xlane.xlu0 %372
        %374 = vadd.xlane.f32.xlu0 %v318
        %v375 = vpop.xlane.xlu0 %374
        %376 = vadd.xlane.f32.xlu0 %v319
        %v377 = vpop.xlane.xlu0 %376
        %378 = vadd.xlane.f32.xlu0 %v320
        %v379 = vpop.xlane.xlu0 %378
        %380 = vadd.xlane.f32.xlu0 %v321
        %v381 = vpop.xlane.xlu0 %380
        %382 = vadd.xlane.f32.xlu0 %v322
        %v383 = vpop.xlane.xlu0 %382
        %384 = vadd.xlane.f32.xlu0 %v323
        %v385 = vpop.xlane.xlu0 %384
        %386 = vadd.xlane.f32.xlu0 %v324
        %v387 = vpop.xlane.xlu0 %386
        %388 = vadd.xlane.f32.xlu0 %v325
        %v389 = vpop.xlane.xlu0 %388
        %v390 = vmul.f32 %v327, %v261
        %v391 = vmul.f32 %v329, %v261
        %v392 = vmul.f32 %v331, %v261
        %v393 = vmul.f32 %v333, %v261
        %v394 = vmul.f32 %v335, %v261
        %v395 = vmul.f32 %v337, %v261
        %v396 = vmul.f32 %v339, %v261
        %v397 = vmul.f32 %v341, %v261
        %v398 = vmul.f32 %v343, %v261
        %v399 = vmul.f32 %v345, %v261
        %v400 = vmul.f32 %v347, %v261
        %v401 = vmul.f32 %v349, %v261
        %v402 = vmul.f32 %v351, %v261
        %v403 = vmul.f32 %v353, %v261
        %v404 = vmul.f32 %v355, %v261
        %v405 = vmul.f32 %v357, %v261
        %v406 = vmul.f32 %v359, %v261
        %v407 = vmul.f32 %v361, %v261
        %v408 = vmul.f32 %v363, %v261
        %v409 = vmul.f32 %v365, %v261
        %v410 = vmul.f32 %v367, %v261
        %v411 = vmul.f32 %v369, %v261
        %v412 = vmul.f32 %v371, %v261
        %v413 = vmul.f32 %v373, %v261
        %v414 = vmul.f32 %v375, %v261
        %v415 = vmul.f32 %v377, %v261
        %v416 = vmul.f32 %v379, %v261
        %v417 = vmul.f32 %v381, %v261
        %v418 = vmul.f32 %v383, %v261
        %v419 = vmul.f32 %v385, %v261
        %v420 = vmul.f32 %v387, %v261
        %v421 = vmul.f32 %v389, %v261
        %v422 = vmul.f32 %v262, %v262
        %v423 = vmul.f32 %v263, %v263
        %v424 = vmul.f32 %v264, %v264
        %v425 = vmul.f32 %v265, %v265
        %v426 = vmul.f32 %v266, %v266
        %v427 = vmul.f32 %v267, %v267
        %v428 = vmul.f32 %v268, %v268
        %v429 = vmul.f32 %v269, %v269
        %v430 = vmul.f32 %v270, %v270
        %v431 = vmul.f32 %v271, %v271
        %v432 = vmul.f32 %v272, %v272
        %v433 = vmul.f32 %v273, %v273
        %v434 = vmul.f32 %v274, %v274
        %v435 = vmul.f32 %v275, %v275
        %v436 = vmul.f32 %v276, %v276
        %v437 = vmul.f32 %v277, %v277
        %v438 = vmul.f32 %v278, %v278
        %v439 = vmul.f32 %v279, %v279
        %v440 = vmul.f32 %v280, %v280
        %v441 = vmul.f32 %v281, %v281
        %v442 = vmul.f32 %v282, %v282
        %v443 = vmul.f32 %v283, %v283
        %v444 = vmul.f32 %v284, %v284
        %v445 = vmul.f32 %v285, %v285
        %v446 = vmul.f32 %v286, %v286
        %v447 = vmul.f32 %v287, %v287
        %v448 = vmul.f32 %v288, %v288
        %v449 = vmul.f32 %v289, %v289
        %v450 = vmul.f32 %v290, %v290
        %v451 = vmul.f32 %v291, %v291
        %v452 = vmul.f32 %v292, %v292
        %v453 = vmul.f32 %v293, %v293
        %v454 = vsub.f32 %v390, %v422
        %v455 = vsub.f32 %v391, %v423
        %v456 = vsub.f32 %v392, %v424
        %v457 = vsub.f32 %v393, %v425
        %v458 = vsub.f32 %v394, %v426
        %v459 = vsub.f32 %v395, %v427
        %v460 = vsub.f32 %v396, %v428
        %v461 = vsub.f32 %v397, %v429
        %v462 = vsub.f32 %v398, %v430
        %v463 = vsub.f32 %v399, %v431
        %v464 = vsub.f32 %v400, %v432
        %v465 = vsub.f32 %v401, %v433
        %v466 = vsub.f32 %v402, %v434
        %v467 = vsub.f32 %v403, %v435
        %v468 = vsub.f32 %v404, %v436
        %v469 = vsub.f32 %v405, %v437
        %v470 = vsub.f32 %v406, %v438
        %v471 = vsub.f32 %v407, %v439
        %v472 = vsub.f32 %v408, %v440
        %v473 = vsub.f32 %v409, %v441
        %v474 = vsub.f32 %v410, %v442
        %v475 = vsub.f32 %v411, %v443
        %v476 = vsub.f32 %v412, %v444
        %v477 = vsub.f32 %v413, %v445
        %v478 = vsub.f32 %v414, %v446
        %v479 = vsub.f32 %v415, %v447
        %v480 = vsub.f32 %v416, %v448
        %v481 = vsub.f32 %v417, %v449
        %v482 = vsub.f32 %v418, %v450
        %v483 = vsub.f32 %v419, %v451
        %v484 = vsub.f32 %v420, %v452
        %v485 = vsub.f32 %v421, %v453
        %v486 = vmax.f32 %v454, 0.0
        %v487 = vmax.f32 %v455, 0.0
        %v488 = vmax.f32 %v456, 0.0
        %v489 = vmax.f32 %v457, 0.0
        %v490 = vmax.f32 %v458, 0.0
        %v491 = vmax.f32 %v459, 0.0
        %v492 = vmax.f32 %v460, 0.0
        %v493 = vmax.f32 %v461, 0.0
        %v494 = vmax.f32 %v462, 0.0
        %v495 = vmax.f32 %v463, 0.0
        %v496 = vmax.f32 %v464, 0.0
        %v497 = vmax.f32 %v465, 0.0
        %v498 = vmax.f32 %v466, 0.0
        %v499 = vmax.f32 %v467, 0.0
        %v500 = vmax.f32 %v468, 0.0
        %v501 = vmax.f32 %v469, 0.0
        %v502 = vmax.f32 %v470, 0.0
        %v503 = vmax.f32 %v471, 0.0
        %v504 = vmax.f32 %v472, 0.0
        %v505 = vmax.f32 %v473, 0.0
        %v506 = vmax.f32 %v474, 0.0
        %v507 = vmax.f32 %v475, 0.0
        %v508 = vmax.f32 %v476, 0.0
        %v509 = vmax.f32 %v477, 0.0
        %v510 = vmax.f32 %v478, 0.0
        %v511 = vmax.f32 %v479, 0.0
        %v512 = vmax.f32 %v480, 0.0
        %v513 = vmax.f32 %v481, 0.0
        %v514 = vmax.f32 %v482, 0.0
        %v515 = vmax.f32 %v483, 0.0
        %v516 = vmax.f32 %v484, 0.0
        %v517 = vmax.f32 %v485, 0.0
        %v518 = vadd.f32 %v486, 1e-05
        %v519 = vadd.f32 %v487, 1e-05
        %v520 = vadd.f32 %v488, 1e-05
        %v521 = vadd.f32 %v489, 1e-05
        %v522 = vadd.f32 %v490, 1e-05
        %v523 = vadd.f32 %v491, 1e-05
        %v524 = vadd.f32 %v492, 1e-05
        %v525 = vadd.f32 %v493, 1e-05
        %v526 = vadd.f32 %v494, 1e-05
        %v527 = vadd.f32 %v495, 1e-05
        %v528 = vadd.f32 %v496, 1e-05
        %v529 = vadd.f32 %v497, 1e-05
        %v530 = vadd.f32 %v498, 1e-05
        %v531 = vadd.f32 %v499, 1e-05
        %v532 = vadd.f32 %v500, 1e-05
        %v533 = vadd.f32 %v501, 1e-05
        %v534 = vadd.f32 %v502, 1e-05
        %v535 = vadd.f32 %v503, 1e-05
        %v536 = vadd.f32 %v504, 1e-05
        %v537 = vadd.f32 %v505, 1e-05
        %v538 = vadd.f32 %v506, 1e-05
        %v539 = vadd.f32 %v507, 1e-05
        %v540 = vadd.f32 %v508, 1e-05
        %v541 = vadd.f32 %v509, 1e-05
        %v542 = vadd.f32 %v510, 1e-05
        %v543 = vadd.f32 %v511, 1e-05
        %v544 = vadd.f32 %v512, 1e-05
        %v545 = vadd.f32 %v513, 1e-05
        %v546 = vadd.f32 %v514, 1e-05
        %v547 = vadd.f32 %v515, 1e-05
        %v548 = vadd.f32 %v516, 1e-05
        %v549 = vadd.f32 %v517, 1e-05
        %v550 = vrsqrt.pop %v518
        %v551 = vrsqrt.pop %v519
        %v552 = vrsqrt.pop %v520
        %v553 = vrsqrt.pop %v521
        %v554 = vrsqrt.pop %v522
        %v555 = vrsqrt.pop %v523
        %v556 = vrsqrt.pop %v524
        %v557 = vrsqrt.pop %v525
        %v558 = vrsqrt.pop %v526
        %v559 = vrsqrt.pop %v527
        %v560 = vrsqrt.pop %v528
        %v561 = vrsqrt.pop %v529
        %v562 = vrsqrt.pop %v530
        %v563 = vrsqrt.pop %v531
        %v564 = vrsqrt.pop %v532
        %v565 = vrsqrt.pop %v533
        %v566 = vrsqrt.pop %v534
        %v567 = vrsqrt.pop %v535
        %v568 = vrsqrt.pop %v536
        %v569 = vrsqrt.pop %v537
        %v570 = vrsqrt.pop %v538
        %v571 = vrsqrt.pop %v539
        %v572 = vrsqrt.pop %v540
        %v573 = vrsqrt.pop %v541
        %v574 = vrsqrt.pop %v542
        %v575 = vrsqrt.pop %v543
        %v576 = vrsqrt.pop %v544
        %v577 = vrsqrt.pop %v545
        %v578 = vrsqrt.pop %v546
        %v579 = vrsqrt.pop %v547
        %v580 = vrsqrt.pop %v548
        %v581 = vrsqrt.pop %v549
        %v583 = vlaneseq
        %v584 = vshrl.u32 %v583, 7
        %v585 = vsub.s32 0, %v584
        %v586 = vrot.slane %v196, %v585
        %v588 = vmul.f32 %v550, %v586
        %v589 = vmul.f32 %v551, %v586
        %v590 = vmul.f32 %v552, %v586
        %v591 = vmul.f32 %v553, %v586
        %v592 = vmul.f32 %v554, %v586
        %v593 = vmul.f32 %v555, %v586
        %v594 = vmul.f32 %v556, %v586
        %v595 = vmul.f32 %v557, %v586
        %v596 = vmul.f32 %v558, %v586
        %v597 = vmul.f32 %v559, %v586
        %v598 = vmul.f32 %v560, %v586
        %v599 = vmul.f32 %v561, %v586
        %v600 = vmul.f32 %v562, %v586
        %v601 = vmul.f32 %v563, %v586
        %v602 = vmul.f32 %v564, %v586
        %v603 = vmul.f32 %v565, %v586
        %v604 = vmul.f32 %v566, %v586
        %v605 = vmul.f32 %v567, %v586
        %v606 = vmul.f32 %v568, %v586
        %v607 = vmul.f32 %v569, %v586
        %v608 = vmul.f32 %v570, %v586
        %v609 = vmul.f32 %v571, %v586
        %v610 = vmul.f32 %v572, %v586
        %v611 = vmul.f32 %v573, %v586
        %v612 = vmul.f32 %v574, %v586
        %v613 = vmul.f32 %v575, %v586
        %v614 = vmul.f32 %v576, %v586
        %v615 = vmul.f32 %v577, %v586
        %v616 = vmul.f32 %v578, %v586
        %v617 = vmul.f32 %v579, %v586
        %v618 = vmul.f32 %v580, %v586
        %v619 = vmul.f32 %v581, %v586
        %v620 = vmul.f32 %v164, %v588
        %v621 = vmul.f32 %v165, %v589
        %v622 = vmul.f32 %v166, %v590
        %v623 = vmul.f32 %v167, %v591
        %v624 = vmul.f32 %v168, %v592
        %v625 = vmul.f32 %v169, %v593
        %v626 = vmul.f32 %v170, %v594
        %v627 = vmul.f32 %v171, %v595
        %v628 = vmul.f32 %v172, %v596
        %v629 = vmul.f32 %v173, %v597
        %v630 = vmul.f32 %v174, %v598
        %v631 = vmul.f32 %v175, %v599
        %v632 = vmul.f32 %v176, %v600
        %v633 = vmul.f32 %v177, %v601
        %v634 = vmul.f32 %v178, %v602
        %v635 = vmul.f32 %v179, %v603
        %v636 = vmul.f32 %v180, %v604
        %v637 = vmul.f32 %v181, %v605
        %v638 = vmul.f32 %v182, %v606
        %v639 = vmul.f32 %v183, %v607
        %v640 = vmul.f32 %v184, %v608
        %v641 = vmul.f32 %v185, %v609
        %v642 = vmul.f32 %v186, %v610
        %v643 = vmul.f32 %v187, %v611
        %v644 = vmul.f32 %v188, %v612
        %v645 = vmul.f32 %v189, %v613
        %v646 = vmul.f32 %v190, %v614
        %v647 = vmul.f32 %v191, %v615
        %v648 = vmul.f32 %v192, %v616
        %v649 = vmul.f32 %v193, %v617
        %v650 = vmul.f32 %v194, %v618
        %v651 = vmul.f32 %v195, %v619
        %652 = vst [vmem:[%s161] sm:$0xff] %v620
        %653 = vst [vmem:[%s161 + $0x8] sm:$0xff] %v621
        %654 = vst [vmem:[%s161 + $0x10] sm:$0xff] %v622
        %655 = vst [vmem:[%s161 + $0x18] sm:$0xff] %v623
        %656 = vst [vmem:[%s161 + $0x20] sm:$0xff] %v624
        %657 = vst [vmem:[%s161 + $0x28] sm:$0xff] %v625
        %658 = vst [vmem:[%s161 + $0x30] sm:$0xff] %v626
        %659 = vst [vmem:[%s161 + $0x38] sm:$0xff] %v627
        %660 = vst [vmem:[%s161 + $0x40] sm:$0xff] %v628
        %661 = vst [vmem:[%s161 + $0x48] sm:$0xff] %v629
        %662 = vst [vmem:[%s161 + $0x50] sm:$0xff] %v630
        %663 = vst [vmem:[%s161 + $0x58] sm:$0xff] %v631
        %664 = vst [vmem:[%s161 + $0x60] sm:$0xff] %v632
        %665 = vst [vmem:[%s161 + $0x68] sm:$0xff] %v633
        %666 = vst [vmem:[%s161 + $0x70] sm:$0xff] %v634
        %667 = vst [vmem:[%s161 + $0x78] sm:$0xff] %v635
        %668 = vst [vmem:[%s161 + $0x80] sm:$0xff] %v636
        %669 = vst [vmem:[%s161 + $0x88] sm:$0xff] %v637
        %670 = vst [vmem:[%s161 + $0x90] sm:$0xff] %v638
        %671 = vst [vmem:[%s161 + $0x98] sm:$0xff] %v639
        %672 = vst [vmem:[%s161 + $0xa0] sm:$0xff] %v640
        %673 = vst [vmem:[%s161 + $0xa8] sm:$0xff] %v641
        %674 = vst [vmem:[%s161 + $0xb0] sm:$0xff] %v642
        %675 = vst [vmem:[%s161 + $0xb8] sm:$0xff] %v643
        %676 = vst [vmem:[%s161 + $0xc0] sm:$0xff] %v644
        %677 = vst [vmem:[%s161 + $0xc8] sm:$0xff] %v645
        %678 = vst [vmem:[%s161 + $0xd0] sm:$0xff] %v646
        %679 = vst [vmem:[%s161 + $0xd8] sm:$0xff] %v647
        %680 = vst [vmem:[%s161 + $0xe0] sm:$0xff] %v648
        %681 = vst [vmem:[%s161 + $0xe8] sm:$0xff] %v649
        %682 = vst [vmem:[%s161 + $0xf0] sm:$0xff] %v650
        %683 = vst [vmem:[%s161 + $0xf8] sm:$0xff] %v651
        %s684 = sand.u32 %s74, 1
        %s685 = scalar_lea.sflag [#allocation4], %s684
        %s686 = sand.u32 %s74, 1
        %s687 = smul.addr %s686, 256
        %s688 = scalar_lea.vmem [#allocation5], %s687
        // Predicated region
        $region33: #{tpu_custom_call.1} parent=27 // pred_check
          %p689 = pneg %p84
        $region34: #{tpu_custom_call.1} parent=27 // pred_check_branch
          %691 = sbr.rel (%p689) target = $region36
        $region35: #{tpu_custom_call.1} parent=27 // pred_region
          %s692 = smul.u32 32, %s19
          %s694 = ssub.s32 4096, 4096
          %695 = vsyncadd %s685, %s694
          %s696 = smul.addr %s692, 128
          %s697 = scalar_lea.hbm %s2, %s696
          %s698 = sshll.u32 %s688, 4
          %s699 = int_to_ptr.vmem [resolvable:$true] %s698
          %704 = dma.vmem_to_hbm [thread:$0]  %s699, 4096, %s697, %s685, 128, 128, 8
        $region36: #{tpu_custom_call.1} parent=27 // pred_fallthru
          _
      $region28: #{tpu_custom_call.1} parent=5 // pred_fallthru
        _
      %p705 = scmp.le.s32.totalorder 2, %s14
      // Predicated region
      $region37: #{tpu_custom_call.1} parent=5 // pred_check
        %p706 = pneg %p705
      $region38: #{tpu_custom_call.1} parent=5 // pred_check_branch
        %708 = sbr.rel (%p706) target = $region40
      $region39: #{tpu_custom_call.1} parent=5 // pred_region
        %s709 = ssub.s32 %s14, 2
        // Predicated region
        $region41: #{tpu_custom_call.1} parent=39 // pred_check
          %p710 = pneg %p90
        $region42: #{tpu_custom_call.1} parent=39 // pred_check_branch
          %712 = sbr.rel (%p710) target = $region44
        $region43: #{tpu_custom_call.1} parent=39 // pred_region
          %s713 = sand.u32 %s75, 1
          %s714 = scalar_lea.sflag [#allocation4], %s713
          %s715 = sand.u32 %s75, 1
          %s716 = smul.addr %s715, 256
          %s717 = scalar_lea.vmem [#allocation5], %s716
          %718 = dma.done %s714, 4096
        $region44: #{tpu_custom_call.1} parent=39 // pred_fallthru
          _
      $region40: #{tpu_custom_call.1} parent=5 // pred_fallthru
        _
    $region6: #{tpu_custom_call.1} parent=1 // loop_footer
      %s18 = sadd.s32 1, %s14
    $region7: #{tpu_custom_call.1} parent=1 // loop_footer_branch
      %13 = sbr.rel target = $region3
    $region8: #{tpu_custom_call.1} parent=1 // loop_exit
      _
    %719 = vsyncpa [#allocation3], 1
    %s720 = scalar_lea.sflag [#allocation3], 1
    %721 = vsyncpa %s720, 1
    %722 = vsyncpa [#allocation4], 1
    %s723 = scalar_lea.sflag [#allocation4], 1
    %724 = vsyncpa %s723, 1

</llo_original>
